<compile_context>
chip_gen: v5e
topology: v5e:2x2
jax: 0.10.0
libtpu: 0.0.40
codegen_flags: <defaults>
</compile_context>

<pallas_src>
import functools

import jax
import jax.numpy as jnp
from jax.experimental import pallas as pl
from jax.experimental.pallas import tpu as pltpu

LANE = 128     # TPU lane width (last dim)
SUBLANE = 8    # TPU sublane width (second-to-last dim, f32)


def _round_up(x, m):
    return (x + m - 1) // m * m


def _ef_kernel(idx_ref, epoch_ref,                    # scalar prefetch (SMEM)
               x_ref, wd_ref, wu_ref, state_in_hbm,   # inputs
               rows_ref, state_out_hbm,               # outputs (state aliased)
               srows_vmem, sem,                       # scratch
               *, valid_rows):
    """Process one block of `tb` selected rows.

    idx_ref       : SMEM (Bp,)  int32  -- row indices into the state
    epoch_ref     : SMEM (1,)   int32
    x_ref         : VMEM (tb, D) f32   -- input rows for this block
    wd_ref        : VMEM (D, Kp) bf16  -- down projection (rank lane-padded)
    wu_ref        : VMEM (Kp, D) bf16  -- up projection
    state_in_hbm  : HBM  (N, D)  f32   -- error-feedback state
    rows_ref      : VMEM (tb, D) f32   -- returned updated rows
    state_out_hbm : HBM  (N, D)  f32   -- same buffer as state_in_hbm (aliased)
    srows_vmem    : VMEM (tb, D) f32   -- gathered state rows
    sem           : DMA semaphores (2,): [0]=gather, [1]=scatter
    """
    tb = x_ref.shape[0]
    base = pl.program_id(0) * tb
    # Number of real (non-padding) rows in this block; always >= 1.
    nrows = jnp.minimum(tb, valid_rows - base)

    def gather_copy(r):
        return pltpu.make_async_copy(
            state_in_hbm.at[pl.ds(idx_ref[base + r], 1), :],
            srows_vmem.at[pl.ds(r, 1), :],
            sem.at[0])

    def scatter_copy(r):
        return pltpu.make_async_copy(
            rows_ref.at[pl.ds(r, 1), :],
            state_out_hbm.at[pl.ds(idx_ref[base + r], 1), :],
            sem.at[1])

    # ---- gather selected state rows: HBM -> VMEM (one small DMA per row) ----
    # epoch == 0: the old state is never read (result is C(x) exactly), so the
    # B gather DMAs are skipped and the scratch is zeroed instead; the unified
    # compute below (s + C(x - s) with s = 0) then reproduces the epoch-0
    # branch bit-exactly (x - 0 == x, 0 + comp == comp in f32).
    @pl.when(epoch_ref[0] == 0)
    def _():
        srows_vmem[...] = jnp.zeros_like(srows_vmem)

    @pl.when(epoch_ref[0] > 0)
    def _():
        # Issue all gathers first, then wait: the DMA engine overlaps them.
        @pl.loop(0, nrows)
        def _(r):
            gather_copy(r).start()

        @pl.loop(0, nrows)
        def _(r):
            gather_copy(r).wait()

    # ---- compute: EF residual -> low-rank compressor -> EF update -----------
    x = x_ref[...].astype(jnp.float32)
    s = srows_vmem[...]
    resid = x - s
    # bf16 MXU inputs, f32 accumulation: native MXU path on v5e/v6e/v7x.
    low = jnp.dot(resid.astype(jnp.bfloat16), wd_ref[...],
                  preferred_element_type=jnp.float32)
    comp = jnp.dot(low.astype(jnp.bfloat16), wu_ref[...],
                   preferred_element_type=jnp.float32)
    rows_ref[...] = (s + comp).astype(rows_ref.dtype)

    # ---- scatter updated rows back into the state: VMEM -> HBM --------------
    @pl.loop(0, nrows)
    def _(r):
        scatter_copy(r).start()

    @pl.loop(0, nrows)
    def _(r):
        scatter_copy(r).wait()


@functools.partial(jax.jit, static_argnames=("max_block_rows",),
                   donate_argnums=(3,))
def ef_forward(epoch, x, indices, state, w_down, w_up, *, max_block_rows=1024):
    """Returns (updated_rows[B, D], updated_state[N, D]).

    `state` is donated and aliased to the second output; only the B selected
    rows are read/written in HBM (no full N x D copy).
    """
    B, D = x.shape
    N, Ds = state.shape
    Kp = w_down.shape[1]
    assert Ds == D and D % LANE == 0, "feature dim must be lane-aligned (x128)"
    assert indices.shape == (B,)
    assert w_up.shape == (Kp, D)

    # Row tile: as large as allowed (feeds the MXU a big M and amortizes the
    # per-grid-step overhead), 8-row aligned; ragged tail handled in-kernel.
    block_rows = _round_up(min(max_block_rows, _round_up(B, SUBLANE)), SUBLANE)
    Bp = _round_up(B, block_rows)
    # VMEM (f32, D=128): x (2 bufs) + rows (2 bufs) + gather scratch
    # = 5 * block_rows * D * 4 B (~2.7 MiB at block_rows=1024) + 2 bf16 weights.
    # Fits the default scoped VMEM on all generations, incl. v7x (64 MiB phys).

    x_p = x.astype(state.dtype)
    idx_p = indices.astype(jnp.int32)
    if Bp != B:
        x_p = jnp.pad(x_p, ((0, Bp - B), (0, 0)))
        idx_p = jnp.pad(idx_p, (0, Bp - B))
    epoch_arr = jnp.reshape(jnp.asarray(epoch, jnp.int32), (1,))

    grid = (Bp // block_rows,)
    kernel = functools.partial(_ef_kernel, valid_rows=B)

    rows_p, new_state = pl.pallas_call(
        kernel,
        out_shape=(
            jax.ShapeDtypeStruct((Bp, D), state.dtype),   # updated rows
            jax.ShapeDtypeStruct((N, D), state.dtype),    # updated state
        ),
        grid_spec=pltpu.PrefetchScalarGridSpec(
            num_scalar_prefetch=2,                         # indices + epoch
            grid=grid,
            in_specs=[
                pl.BlockSpec((block_rows, D), lambda i, idx, ep: (i, 0)),  # x
                pl.BlockSpec((D, Kp), lambda i, idx, ep: (0, 0)),          # W_down
                pl.BlockSpec((Kp, D), lambda i, idx, ep: (0, 0)),          # W_up
                pl.BlockSpec(memory_space=pl.ANY),                         # state (HBM)
            ],
            out_specs=(
                pl.BlockSpec((block_rows, D), lambda i, idx, ep: (i, 0)),  # rows
                pl.BlockSpec(memory_space=pl.ANY),                         # state (HBM)
            ),
            scratch_shapes=[
                pltpu.VMEM((block_rows, D), state.dtype),   # gathered state rows
                pltpu.SemaphoreType.DMA((2,)),              # gather / scatter sems
            ],
        ),
        # Flat inputs: 0=indices 1=epoch 2=x 3=w_down 4=w_up 5=state.
        input_output_aliases={5: 1},            # update the state in place
        compiler_params=pltpu.CompilerParams(
            dimension_semantics=("parallel",)),  # shard row blocks on v7x's 2 TCs
    )(idx_p, epoch_arr, x_p, w_down, w_up, state)

    return rows_p[:B], new_state


class EFCompressorPallas:
    """JAX/Pallas equivalent of the PyTorch EFCompressor module."""

    def __init__(self, shape, rank, key):
        self.shape = tuple(shape)                    # (N, D)
        D = self.shape[-1]
        kp = _round_up(rank, LANE)                   # lane-pad the rank
        k0, k1 = jax.random.split(key)
        wd = jax.random.normal(k0, (D, rank), jnp.float32) / jnp.sqrt(D)
        wu = jax.random.normal(k1, (rank, D), jnp.float32) / jnp.sqrt(rank)
        # Zero-pad rank to a lane multiple (exact) and pre-cast to bf16 so the
        # MXU runs its native precision path without in-loop casts.
        self.w_down = jnp.pad(wd, ((0, 0), (0, kp - rank))).astype(jnp.bfloat16)
        self.w_up = jnp.pad(wu, ((0, kp - rank), (0, 0))).astype(jnp.bfloat16)
        self.state = None
        # TODO(synk): the PyTorch full-backward hook (identity gradient
        # passthrough) is backward-only and has no forward-pass Pallas
        # equivalent; only the forward semantics are kernelized.

    def __call__(self, x, indices, epoch):
        if self.state is None:
            self.state = jnp.zeros(self.shape, jnp.float32)
        new_rows, self.state = ef_forward(
            jnp.int32(epoch), x, jnp.asarray(indices, jnp.int32),
            self.state, self.w_down, self.w_up)
        return new_rows


def _reference(epoch, x, state_rows, w_down, w_up):
    """Pure-JAX reference with the same bf16-MXU / f32-accumulate math."""
    g = jnp.float32(1.0 if epoch != 0 else 0.0)
    resid = (x.astype(jnp.float32) - g * state_rows).astype(jnp.bfloat16)
    low = jnp.dot(resid, w_down, preferred_element_type=jnp.float32)
    comp = jnp.dot(low.astype(jnp.bfloat16), w_up,
                   preferred_element_type=jnp.float32)
    return g * state_rows + comp


if __name__ == "__main__":
    key = jax.random.PRNGKey(0)
    k_mod, k_x0, k_x1 = jax.random.split(key, 3)

    N, D, RANK, B = 16, 128, 32, 6        # state (16, 128); 6 selected rows
    module = EFCompressorPallas((N, D), RANK, k_mod)

    indices = jnp.array([0, 2, 5, 7, 9, 14], dtype=jnp.int32)
    x0 = jax.random.normal(k_x0, (B, D), jnp.float32)
    x1 = jax.random.normal(k_x1, (B, D), jnp.float32)

    sel_mask = jnp.zeros((N,), dtype=bool).at[indices].set(True)
    unsel = jnp.where(sel_mask, 0.0, 1.0)[:, None]

    # ---- epoch 0 path -------------------------------------------------------
    out0 = module(x0, indices, epoch=0)
    jax.block_until_ready(out0)
    ref0 = _reference(0, x0, jnp.zeros((B, D), jnp.float32),
                      module.w_down, module.w_up)
    assert out0.shape == (B, D)
    assert jnp.allclose(out0, ref0, atol=1e-2, rtol=1e-2)
    assert jnp.allclose(module.state[indices], out0, atol=1e-6)
    assert float(jnp.abs(module.state * unsel).max()) == 0.0   # untouched rows

    # ---- epoch > 0 path (error feedback uses the stored state) --------------
    state_before1 = module.state[indices]
    out1 = module(x1, indices, epoch=1)
    jax.block_until_ready(out1)
    ref1 = _reference(1, x1, state_before1, module.w_down, module.w_up)
    assert jnp.allclose(out1, ref1, atol=1e-2, rtol=1e-2)
    assert jnp.allclose(module.state[indices], out1, atol=1e-6)
    assert float(jnp.abs(module.state * unsel).max()) == 0.0

    print("KERNEL_OK")
</pallas_src>

<mosaic_0001>
module attributes {stable_mosaic.version = 11 : i64} {
  func.func @_ef_kernel(%arg0: i32, %arg1: memref<8xi32, #tpu.memory_space<smem>>, %arg2: memref<1xi32, #tpu.memory_space<smem>>, %arg3: memref<8x128xf32, #tpu.memory_space<vmem>>, %arg4: memref<128x128xbf16, #tpu.memory_space<vmem>>, %arg5: memref<128x128xbf16, #tpu.memory_space<vmem>>, %arg6: memref<16x128xf32, #tpu.memory_space<any>>, %arg7: memref<8x128xf32, #tpu.memory_space<vmem>>, %arg8: memref<16x128xf32, #tpu.memory_space<any>>, %arg9: memref<8x128xf32, #tpu.memory_space<vmem>>, %arg10: memref<2x!tpu.dma_semaphore, #tpu.memory_space<semaphore_mem>>) attributes {dimension_semantics = [#tpu.dimension_semantics<parallel>], iteration_bounds = array<i64: 1>, scalar_prefetch = 2 : i64, scratch_operands = 2 : i64, tpu.core_type = #tpu.core_type<tc>, window_params = [{transform_indices = @transform_0, window_bounds = array<i64: 8, 128>}, {pipeline_mode = #tpu.pipeline_mode<synchronous>, transform_indices = @transform_1, window_bounds = array<i64: 128, 128>}, {pipeline_mode = #tpu.pipeline_mode<synchronous>, transform_indices = @transform_2, window_bounds = array<i64: 128, 128>}, {}, {transform_indices = @transform_4, window_bounds = array<i64: 8, 128>}, {}]} {
    %c8_i32 = arith.constant 8 : i32
    %0 = arith.muli %arg0, %c8_i32 : i32
    %c6_i32 = arith.constant 6 : i32
    %1 = arith.subi %c6_i32, %0 : i32
    %c8_i32_0 = arith.constant 8 : i32
    %2 = arith.minsi %c8_i32_0, %1 : i32
    %c0 = arith.constant 0 : index
    %3 = memref.load %arg2[%c0] : memref<1xi32, #tpu.memory_space<smem>>
    %c0_i32 = arith.constant 0 : i32
    %4 = arith.cmpi eq, %3, %c0_i32 : i32
    %5 = arith.extui %4 : i1 to i32
    %c0_i32_1 = arith.constant 0 : i32
    %6 = arith.cmpi ne, %5, %c0_i32_1 : i32
    scf.if %6 {
      %cst_31 = arith.constant 0.000000e+00 : f32
      %34 = vector.broadcast %cst_31 : f32 to vector<8x128xf32>
      %c0_32 = arith.constant 0 : index
      %c0_33 = arith.constant 0 : index
      %35 = vector.load %arg9[%c0_32, %c0_33] : memref<8x128xf32, #tpu.memory_space<vmem>>, vector<8x128xf32>
      tpu.vector_store %arg9[%c0_32, %c0_33], %34 {strides = array<i32>} : memref<8x128xf32, #tpu.memory_space<vmem>>, vector<8x128xf32>,
    } else {
    }
    %c0_2 = arith.constant 0 : index
    %7 = memref.load %arg2[%c0_2] : memref<1xi32, #tpu.memory_space<smem>>
    %c0_i32_3 = arith.constant 0 : i32
    %8 = arith.cmpi sgt, %7, %c0_i32_3 : i32
    %9 = arith.extui %8 : i1 to i32
    %c0_i32_4 = arith.constant 0 : i32
    %10 = arith.cmpi ne, %9, %c0_i32_4 : i32
    scf.if %10 {
      %c0_i32_31 = arith.constant 0 : i32
      %34 = arith.subi %2, %c0_i32_31 : i32
      %c1_i32_32 = arith.constant 1 : i32
      %c1_i32_33 = arith.constant 1 : i32
      %35 = arith.subi %c1_i32_32, %c1_i32_33 : i32
      %36 = arith.addi %34, %35 : i32
      %c1_i32_34 = arith.constant 1 : i32
      %37 = arith.divsi %36, %c1_i32_34 : i32
      %c1_i32_35 = arith.constant 1 : i32
      %c0_i32_36 = arith.constant 0 : i32
      %c0_i32_37 = arith.constant 0 : i32
      %38 = arith.subi %37, %c0_i32_37 : i32
      %39 = arith.addi %c0_i32_37, %38 : i32
      %c1_i32_38 = arith.constant 1 : i32
      scf.for %arg11 = %c0_i32_37 to %39 step %c1_i32_38  : i32 {
        %46 = arith.muli %arg11, %c1_i32_35 : i32
        %47 = arith.addi %c0_i32_36, %46 : i32
        %48 = arith.addi %0, %47 : i32
        %49 = arith.index_cast %48 : i32 to index
        %50 = memref.load %arg1[%49] : memref<8xi32, #tpu.memory_space<smem>>
        %c0_i32_47 = arith.constant 0 : i32
        %c0_i32_48 = arith.constant 0 : i32
        %51 = tpu.memref_slice %arg6[%50, %c0_i32_48] : memref<16x128xf32, #tpu.memory_space<any>> -> memref<1x128xf32, #tpu.memory_space<any>>
        %c0_i32_49 = arith.constant 0 : i32
        %52 = tpu.memref_slice %arg9[%47, %c0_i32_49] : memref<8x128xf32, #tpu.memory_space<vmem>> -> memref<1x128xf32, #tpu.memory_space<vmem>>
        %53 = tpu.memref_slice %arg10[%c0_i32_47] : memref<2x!tpu.dma_semaphore, #tpu.memory_space<semaphore_mem>> -> memref<1x!tpu.dma_semaphore, #tpu.memory_space<semaphore_mem>>
        %54 = tpu.memref_squeeze %53 : memref<1x!tpu.dma_semaphore, #tpu.memory_space<semaphore_mem>> -> memref<!tpu.dma_semaphore, #tpu.memory_space<semaphore_mem>>
        tpu.enqueue_dma source(%51 : memref<1x128xf32, #tpu.memory_space<any>>) target(%52 : memref<1x128xf32, #tpu.memory_space<vmem>>) target_semaphore(%54 : memref<!tpu.dma_semaphore, #tpu.memory_space<semaphore_mem>>)
      }
      %c0_i32_39 = arith.constant 0 : i32
      %40 = arith.subi %2, %c0_i32_39 : i32
      %c1_i32_40 = arith.constant 1 : i32
      %c1_i32_41 = arith.constant 1 : i32
      %41 = arith.subi %c1_i32_40, %c1_i32_41 : i32
      %42 = arith.addi %40, %41 : i32
      %c1_i32_42 = arith.constant 1 : i32
      %43 = arith.divsi %42, %c1_i32_42 : i32
      %c1_i32_43 = arith.constant 1 : i32
      %c0_i32_44 = arith.constant 0 : i32
      %c0_i32_45 = arith.constant 0 : i32
      %44 = arith.subi %43, %c0_i32_45 : i32
      %45 = arith.addi %c0_i32_45, %44 : i32
      %c1_i32_46 = arith.constant 1 : i32
      scf.for %arg11 = %c0_i32_45 to %45 step %c1_i32_46  : i32 {
        %46 = arith.muli %arg11, %c1_i32_43 : i32
        %47 = arith.addi %c0_i32_44, %46 : i32
        %48 = arith.addi %0, %47 : i32
        %49 = arith.index_cast %48 : i32 to index
        %50 = memref.load %arg1[%49] : memref<8xi32, #tpu.memory_space<smem>>
        %c0_i32_47 = arith.constant 0 : i32
        %c0_i32_48 = arith.constant 0 : i32
        %51 = tpu.memref_slice %arg6[%50, %c0_i32_48] : memref<16x128xf32, #tpu.memory_space<any>> -> memref<1x128xf32, #tpu.memory_space<any>>
        %c0_i32_49 = arith.constant 0 : i32
        %52 = tpu.memref_slice %arg9[%47, %c0_i32_49] : memref<8x128xf32, #tpu.memory_space<vmem>> -> memref<1x128xf32, #tpu.memory_space<vmem>>
        %53 = tpu.memref_slice %arg10[%c0_i32_47] : memref<2x!tpu.dma_semaphore, #tpu.memory_space<semaphore_mem>> -> memref<1x!tpu.dma_semaphore, #tpu.memory_space<semaphore_mem>>
        %54 = tpu.memref_squeeze %53 : memref<1x!tpu.dma_semaphore, #tpu.memory_space<semaphore_mem>> -> memref<!tpu.dma_semaphore, #tpu.memory_space<semaphore_mem>>
        tpu.wait_dma2 semaphore(%54 : memref<!tpu.dma_semaphore, #tpu.memory_space<semaphore_mem>>) src(%51 : memref<1x128xf32, #tpu.memory_space<any>>) dst(%52 : memref<1x128xf32, #tpu.memory_space<vmem>>)
      }
    } else {
    }
    %c0_5 = arith.constant 0 : index
    %c0_6 = arith.constant 0 : index
    %11 = vector.load %arg3[%c0_5, %c0_6] : memref<8x128xf32, #tpu.memory_space<vmem>>, vector<8x128xf32>
    %c0_7 = arith.constant 0 : index
    %c0_8 = arith.constant 0 : index
    %12 = vector.load %arg9[%c0_7, %c0_8] : memref<8x128xf32, #tpu.memory_space<vmem>>, vector<8x128xf32>
    %13 = arith.subf %11, %12 : vector<8x128xf32>
    %14 = arith.truncf %13 : vector<8x128xf32> to vector<8x128xbf16>
    %c0_9 = arith.constant 0 : index
    %c0_10 = arith.constant 0 : index
    %15 = vector.load %arg4[%c0_9, %c0_10] : memref<128x128xbf16, #tpu.memory_space<vmem>>, vector<128x128xbf16>
    %cst = arith.constant dense<0.000000e+00> : vector<8x128xf32>
    %16 = tpu.matmul %14, %15, %cst {dimension_numbers = #tpu.dot_dimension_numbers<[1], [0], [0], [1], [0, 0, 1, 1], [], []>} : vector<8x128xbf16>, vector<128x128xbf16>, vector<8x128xf32> -> vector<8x128xf32>
    %17 = arith.truncf %16 : vector<8x128xf32> to vector<8x128xbf16>
    %c0_11 = arith.constant 0 : index
    %c0_12 = arith.constant 0 : index
    %18 = vector.load %arg5[%c0_11, %c0_12] : memref<128x128xbf16, #tpu.memory_space<vmem>>, vector<128x128xbf16>
    %cst_13 = arith.constant dense<0.000000e+00> : vector<8x128xf32>
    %19 = tpu.matmul %17, %18, %cst_13 {dimension_numbers = #tpu.dot_dimension_numbers<[1], [0], [0], [1], [0, 0, 1, 1], [], []>} : vector<8x128xbf16>, vector<128x128xbf16>, vector<8x128xf32> -> vector<8x128xf32>
    %20 = arith.addf %12, %19 : vector<8x128xf32>
    %c0_14 = arith.constant 0 : index
    %c0_15 = arith.constant 0 : index
    %21 = vector.load %arg7[%c0_14, %c0_15] : memref<8x128xf32, #tpu.memory_space<vmem>>, vector<8x128xf32>
    tpu.vector_store %arg7[%c0_14, %c0_15], %20 {strides = array<i32>} : memref<8x128xf32, #tpu.memory_space<vmem>>, vector<8x128xf32>,
    %c0_i32_16 = arith.constant 0 : i32
    %22 = arith.subi %2, %c0_i32_16 : i32
    %c1_i32 = arith.constant 1 : i32
    %c1_i32_17 = arith.constant 1 : i32
    %23 = arith.subi %c1_i32, %c1_i32_17 : i32
    %24 = arith.addi %22, %23 : i32
    %c1_i32_18 = arith.constant 1 : i32
    %25 = arith.divsi %24, %c1_i32_18 : i32
    %c1_i32_19 = arith.constant 1 : i32
    %c0_i32_20 = arith.constant 0 : i32
    %c0_i32_21 = arith.constant 0 : i32
    %26 = arith.subi %25, %c0_i32_21 : i32
    %27 = arith.addi %c0_i32_21, %26 : i32
    %c1_i32_22 = arith.constant 1 : i32
    scf.for %arg11 = %c0_i32_21 to %27 step %c1_i32_22  : i32 {
      %34 = arith.muli %arg11, %c1_i32_19 : i32
      %35 = arith.addi %c0_i32_20, %34 : i32
      %36 = arith.addi %0, %35 : i32
      %37 = arith.index_cast %36 : i32 to index
      %38 = memref.load %arg1[%37] : memref<8xi32, #tpu.memory_space<smem>>
      %c1_i32_31 = arith.constant 1 : i32
      %c0_i32_32 = arith.constant 0 : i32
      %39 = tpu.memref_slice %arg7[%35, %c0_i32_32] : memref<8x128xf32, #tpu.memory_space<vmem>> -> memref<1x128xf32, #tpu.memory_space<vmem>>
      %c0_i32_33 = arith.constant 0 : i32
      %40 = tpu.memref_slice %arg8[%38, %c0_i32_33] : memref<16x128xf32, #tpu.memory_space<any>> -> memref<1x128xf32, #tpu.memory_space<any>>
      %41 = tpu.memref_slice %arg10[%c1_i32_31] : memref<2x!tpu.dma_semaphore, #tpu.memory_space<semaphore_mem>> -> memref<1x!tpu.dma_semaphore, #tpu.memory_space<semaphore_mem>>
      %42 = tpu.memref_squeeze %41 : memref<1x!tpu.dma_semaphore, #tpu.memory_space<semaphore_mem>> -> memref<!tpu.dma_semaphore, #tpu.memory_space<semaphore_mem>>
      tpu.enqueue_dma source(%39 : memref<1x128xf32, #tpu.memory_space<vmem>>) target(%40 : memref<1x128xf32, #tpu.memory_space<any>>) target_semaphore(%42 : memref<!tpu.dma_semaphore, #tpu.memory_space<semaphore_mem>>)
    }
    %c0_i32_23 = arith.constant 0 : i32
    %28 = arith.subi %2, %c0_i32_23 : i32
    %c1_i32_24 = arith.constant 1 : i32
    %c1_i32_25 = arith.constant 1 : i32
    %29 = arith.subi %c1_i32_24, %c1_i32_25 : i32
    %30 = arith.addi %28, %29 : i32
    %c1_i32_26 = arith.constant 1 : i32
    %31 = arith.divsi %30, %c1_i32_26 : i32
    %c1_i32_27 = arith.constant 1 : i32
    %c0_i32_28 = arith.constant 0 : i32
    %c0_i32_29 = arith.constant 0 : i32
    %32 = arith.subi %31, %c0_i32_29 : i32
    %33 = arith.addi %c0_i32_29, %32 : i32
    %c1_i32_30 = arith.constant 1 : i32
    scf.for %arg11 = %c0_i32_29 to %33 step %c1_i32_30  : i32 {
      %34 = arith.muli %arg11, %c1_i32_27 : i32
      %35 = arith.addi %c0_i32_28, %34 : i32
      %36 = arith.addi %0, %35 : i32
      %37 = arith.index_cast %36 : i32 to index
      %38 = memref.load %arg1[%37] : memref<8xi32, #tpu.memory_space<smem>>
      %c1_i32_31 = arith.constant 1 : i32
      %c0_i32_32 = arith.constant 0 : i32
      %39 = tpu.memref_slice %arg7[%35, %c0_i32_32] : memref<8x128xf32, #tpu.memory_space<vmem>> -> memref<1x128xf32, #tpu.memory_space<vmem>>
      %c0_i32_33 = arith.constant 0 : i32
      %40 = tpu.memref_slice %arg8[%38, %c0_i32_33] : memref<16x128xf32, #tpu.memory_space<any>> -> memref<1x128xf32, #tpu.memory_space<any>>
      %41 = tpu.memref_slice %arg10[%c1_i32_31] : memref<2x!tpu.dma_semaphore, #tpu.memory_space<semaphore_mem>> -> memref<1x!tpu.dma_semaphore, #tpu.memory_space<semaphore_mem>>
      %42 = tpu.memref_squeeze %41 : memref<1x!tpu.dma_semaphore, #tpu.memory_space<semaphore_mem>> -> memref<!tpu.dma_semaphore, #tpu.memory_space<semaphore_mem>>
      tpu.wait_dma2 semaphore(%42 : memref<!tpu.dma_semaphore, #tpu.memory_space<semaphore_mem>>) src(%39 : memref<1x128xf32, #tpu.memory_space<vmem>>) dst(%40 : memref<1x128xf32, #tpu.memory_space<any>>)
    }
    return
  }
  func.func @transform_0(%arg0: i32, %arg1: memref<8xi32, #tpu.memory_space<smem>>, %arg2: memref<1xi32, #tpu.memory_space<smem>>) -> (i32, i32) {
    %c0_i32 = arith.constant 0 : i32
    %c0_i32_0 = arith.constant 0 : i32
    return %arg0, %c0_i32 : i32, i32
  }
  func.func @transform_1(%arg0: i32, %arg1: memref<8xi32, #tpu.memory_space<smem>>, %arg2: memref<1xi32, #tpu.memory_space<smem>>) -> (i32, i32) {
    %c0_i32 = arith.constant 0 : i32
    %c0_i32_0 = arith.constant 0 : i32
    %c0_i32_1 = arith.constant 0 : i32
    return %c0_i32, %c0_i32_0 : i32, i32
  }
  func.func @transform_2(%arg0: i32, %arg1: memref<8xi32, #tpu.memory_space<smem>>, %arg2: memref<1xi32, #tpu.memory_space<smem>>) -> (i32, i32) {
    %c0_i32 = arith.constant 0 : i32
    %c0_i32_0 = arith.constant 0 : i32
    %c0_i32_1 = arith.constant 0 : i32
    return %c0_i32, %c0_i32_0 : i32, i32
  }
  func.func @transform_4(%arg0: i32, %arg1: memref<8xi32, #tpu.memory_space<smem>>, %arg2: memref<1xi32, #tpu.memory_space<smem>>) -> (i32, i32) {
    %c0_i32 = arith.constant 0 : i32
    %c0_i32_0 = arith.constant 0 : i32
    return %arg0, %c0_i32 : i32, i32
  }
}

</mosaic_0001>

<llo_original>
// kernel: ef_forward.1
$region0: #{ef_forward.1}
  #allocation0 [shape = 'u32[]', space=smem, size = 0x4, offset = 0x4, fixed_abs, tag = 'smem constant byte address 0x4 - core index']
  #allocation1 [shape = 'u32[72,128]{1,0:T(1,128)}', space=vmem, size = 0x9000, scoped, tag = 'internal scratch']
  #allocation2 [shape = 'f32[8,128]{1,0:T(8,128)}', space=vmem, size = 0x1000, scoped, tag = 'scratch operand']
  #allocation3 [shape = 's32[2]{0}', space=sflag, size = 0x8, scoped, tag = 'scratch operand']
  #allocation4 [shape = 's32[1]{0}', space=sflag, size = 0x4, scoped, tag = 'scoped memory for ef_forward.1']
  #allocation5 [shape = 'u8[512]{0}', space=smem, size = 0x200, scoped, tag = 'prefetched SMEM operand 0']
  #allocation6 [shape = 's32[1]{0:T(128)S(6)}', space=smem, size = 0x200, scoped, tag = 'prefetched SMEM operand 1']
  #allocation13 [shape = 's32[]', space=sflag, size = 0x4, offset = 0, fixed_abs, tag = 'sflag constant byte address 0x0 - dummy sync flag']
  #allocation14 [shape = 's32[]', space=sflag, size = 0x4, offset = 0, fixed_abs, tag = 'sflag constant byte address 0x0 - dummy sync flag']
  %s0 = inlined_call_operand.vmem [shape: s32[8], index: 0, kind: input, shape index: {}]
  %s1 = inlined_call_operand.<no memory space> [shape: s32[1], index: 1, kind: input, shape index: {}]
  %s2 = inlined_call_operand.vmem [shape: f32[8,128], index: 2, kind: input, shape index: {}]
  %s3 = inlined_call_operand.hbm [shape: bf16[128,128], index: 3, kind: input, shape index: {}]
  %s4 = inlined_call_operand.hbm [shape: bf16[128,128], index: 4, kind: input, shape index: {}]
  %s5 = inlined_call_operand.vmem [shape: f32[16,128], index: 5, kind: input, shape index: {}, may-alias: {5,7}]
  %s6 = inlined_call_operand.hbm [shape: f32[8,128], index: 6, kind: output, shape index: {0}]
  %s7 = inlined_call_operand.vmem [shape: f32[16,128], index: 7, kind: output, shape index: {1}, may-alias: {5,7}]
  %8 = xla_tuple %s6, %s7
  %s9 = sld [smem:[#allocation0]]
  $region126: #{ef_forward.1} parent=0
    _
  %s11 = ssub.s32 1, %s9
  %s12 = scalar_select 0, %s11, %s9
  %s14 = sshll.u32 %s0, 4
  %s15 = int_to_ptr.vmem [resolvable:$true] %s14
  %17 = dma.vmem_to_smem %s15, 16, [#allocation5], [#allocation4]
  %18 = sst [smem:[#allocation6]] %s1
  %20 = dma.done [#allocation4], 16
  %21 = sfence
  $region1: #{ef_forward.1} parent=0
    #allocation7 [shape = 'u8[32768]{0}', space=vmem, size = 0x8000, scoped, tag = 'input window, operand 3, single buffered']
    #allocation8 [shape = 's32[1]{0}', space=sflag, size = 0x4, scoped, tag = 'scoped memory for ef_forward.1']
    #allocation9 [shape = 's32[1]{0}', space=sflag, size = 0x4, scoped, tag = 'scoped memory for ef_forward.1']
    #allocation10 [shape = 'u8[32768]{0}', space=vmem, size = 0x8000, scoped, tag = 'input window, operand 4, single buffered']
    #allocation11 [shape = 's32[1]{0}', space=sflag, size = 0x4, scoped, tag = 'scoped memory for ef_forward.1']
    #allocation12 [shape = 'u8[4096]{0}', space=vmem, size = 0x1000, scoped, tag = 'output window, operand 0, single buffered']
    %22 = vsyncpa [#allocation8], 0
    %23 = vsyncpa [#allocation11], 0
    %24 = vsyncpa [#allocation9], 0
    // Predicated region
    $region2: #{ef_forward.1} parent=1 // pred_check
      _
    $region3: #{ef_forward.1} parent=1 // pred_check_branch
      %26 = sbr.rel (0) target = $region5
    $region4: #{ef_forward.1} parent=1 // pred_region
      _
    $region5: #{ef_forward.1} parent=1 // pred_fallthru
      _
    // Predicated region
    $region6: #{ef_forward.1} parent=1 // pred_check
      _
    $region7: #{ef_forward.1} parent=1 // pred_check_branch
      %28 = sbr.rel (0) target = $region9
    $region8: #{ef_forward.1} parent=1 // pred_region
      %30 = vsyncadd [#allocation8], 0
      %s31 = sshll.u32 %s3, 4
      %s32 = int_to_ptr.hbm [resolvable:$true] %s31
      %s33 = sshll.u32 [#allocation7], 4
      %s34 = int_to_ptr.vmem [resolvable:$true] %s33
      %39 = dma.hbm_to_vmem [thread:$0]  %s32, 1024, %s34, [#allocation8], 64, 64, 4
    $region9: #{ef_forward.1} parent=1 // pred_fallthru
      _
    // Predicated region
    $region10: #{ef_forward.1} parent=1 // pred_check
      _
    $region11: #{ef_forward.1} parent=1 // pred_check_branch
      %41 = sbr.rel (0) target = $region13
    $region12: #{ef_forward.1} parent=1 // pred_region
      %43 = vsyncadd [#allocation11], 0
      %s44 = sshll.u32 %s4, 4
      %s45 = int_to_ptr.hbm [resolvable:$true] %s44
      %s46 = sshll.u32 [#allocation10], 4
      %s47 = int_to_ptr.vmem [resolvable:$true] %s46
      %52 = dma.hbm_to_vmem [thread:$0]  %s45, 1024, %s47, [#allocation11], 64, 64, 4
    $region13: #{ef_forward.1} parent=1 // pred_fallthru
      _
    // Predicated region
    $region14: #{ef_forward.1} parent=1 // pred_check
      _
    $region15: #{ef_forward.1} parent=1 // pred_check_branch
      %54 = sbr.rel (0) target = $region17
    $region16: #{ef_forward.1} parent=1 // pred_region
      %56 = dma.done [#allocation8], 1024
    $region17: #{ef_forward.1} parent=1 // pred_fallthru
      _
    // Predicated region
    $region18: #{ef_forward.1} parent=1 // pred_check
      _
    $region19: #{ef_forward.1} parent=1 // pred_check_branch
      %58 = sbr.rel (0) target = $region21
    $region20: #{ef_forward.1} parent=1 // pred_region
      %60 = dma.done [#allocation11], 1024
    $region21: #{ef_forward.1} parent=1 // pred_fallthru
      _
    %s61 = smul.u32 0, 8
    %s62 = ssub.s32 6, %s61
    %p63 = scmp.lt.s32.totalorder %s62, 8
    %s64 = scalar_select %p63, %s62, 8
    %s65 = sld [smem:[#allocation6]]
    %p66 = scmp.eq.s32.totalorder %s65, 0
    // Predicated region
    $region22: #{ef_forward.1} parent=1 // pred_check
      %p67 = pneg %p66
    $region23: #{ef_forward.1} parent=1 // pred_check_branch
      %69 = sbr.rel (%p67) target = $region25
    $region24: #{ef_forward.1} parent=1 // pred_region
      %70 = vst [vmem:[#allocation2] sm:$0xff] 0.0
    $region25: #{ef_forward.1} parent=1 // pred_fallthru
      _
    %s71 = sld [smem:[#allocation6]]
    %p72 = scmp.gt.s32.totalorder %s71, 0
    // Predicated region
    $region26: #{ef_forward.1} parent=1 // pred_check
      %p73 = pneg %p72
    $region27: #{ef_forward.1} parent=1 // pred_check_branch
      %75 = sbr.rel (%p73) target = $region29
    $region28: #{ef_forward.1} parent=1 // pred_region
      // While loop
      $region30: #{ef_forward.1} parent=28 // loop_pre_header
        _
      $region31: #{ef_forward.1} parent=28 // loop_header
        %s77 = sphi 0, %s79
        %p78 = scmp.ge.s32.totalorder %s77, %s64
      $region32: #{ef_forward.1} parent=28 // loop_header_branch
        %81 = sbr.rel (%p78) target = $region36
      $region33: #{ef_forward.1} parent=28 // loop_body
        %s82 = sadd.s32 %s61, %s77
        %s83 = sld [smem:[#allocation5 + %s82]]
        %s84 = scalar_lea.vmem %s5, %s83
        %s85 = scalar_lea.vmem [#allocation2], %s77
        // Predicated region
        $region37: #{ef_forward.1} parent=33 // pred_check
          _
        $region38: #{ef_forward.1} parent=33 // pred_check_branch
          %87 = sbr.rel target = $region40
        $region39: #{ef_forward.1} parent=33 // pred_region
          // Predicated region
          $region52: #{ef_forward.1} parent=39 // pred_check
            _
          $region53: #{ef_forward.1} parent=39 // pred_check_branch
            %103 = sbr.rel (0) target = $region55
          $region54: #{ef_forward.1} parent=39 // pred_region
            %s105 = ssub.s32 2, 1
            loop: start=0, step=1, limit=1
            $region56: #{ef_forward.1} parent=54 // loop_pre_header
              _
            $region57: #{ef_forward.1} parent=54 // loop_header
              %s107 = sphi 0, %s111
              %p108 = scmp.ge.s32.totalorder %s107, 1
              %s112 = sphi %s84, %s84
              %s113 = sphi %s85, %s85
            $region58: #{ef_forward.1} parent=54 // loop_header_branch
              %110 = sbr.rel (%p108) target = $region62
            $region59: #{ef_forward.1} parent=54 // loop_body
              %v114 = vld [vmem:[%s112] sm:%s105]
              %115 = vst [vmem:[%s113] sm:%s105] %v114
            $region60: #{ef_forward.1} parent=54 // loop_footer
              %s111 = sadd.s32 1, %s107
            $region61: #{ef_forward.1} parent=54 // loop_footer_branch
              %106 = sbr.rel target = $region57
            $region62: #{ef_forward.1} parent=54 // loop_exit
              _
          $region55: #{ef_forward.1} parent=39 // pred_fallthru
            _
        $region40: #{ef_forward.1} parent=33 // pred_fallthru
          _
        // Predicated region
        $region41: #{ef_forward.1} parent=33 // pred_check
          _
        $region42: #{ef_forward.1} parent=33 // pred_check_branch
          %89 = sbr.rel (0) target = $region44
        $region43: #{ef_forward.1} parent=33 // pred_region
          %s91 = ssub.s32 2, 1
          loop: start=0, step=1, limit=1
          $region45: #{ef_forward.1} parent=43 // loop_pre_header
            _
          $region46: #{ef_forward.1} parent=43 // loop_header
            %s93 = sphi 0, %s97
            %p94 = scmp.ge.s32.totalorder %s93, 1
            %s98 = sphi %s84, %s84
            %s99 = sphi %s85, %s85
          $region47: #{ef_forward.1} parent=43 // loop_header_branch
            %96 = sbr.rel (%p94) target = $region51
          $region48: #{ef_forward.1} parent=43 // loop_body
            %v100 = vld [vmem:[%s98] sm:%s91]
            %101 = vst [vmem:[%s99] sm:%s91] %v100
          $region49: #{ef_forward.1} parent=43 // loop_footer
            %s97 = sadd.s32 1, %s93
          $region50: #{ef_forward.1} parent=43 // loop_footer_branch
            %92 = sbr.rel target = $region46
          $region51: #{ef_forward.1} parent=43 // loop_exit
            _
        $region44: #{ef_forward.1} parent=33 // pred_fallthru
          _
        // Predicated region
        $region63: #{ef_forward.1} parent=33 // pred_check
          _
        $region64: #{ef_forward.1} parent=33 // pred_check_branch
          %118 = sbr.rel (0) target = $region66
        $region65: #{ef_forward.1} parent=33 // pred_region
          %119 = vsyncadd [#allocation3], 16
        $region66: #{ef_forward.1} parent=33 // pred_fallthru
          _
      $region34: #{ef_forward.1} parent=28 // loop_footer
        %s79 = sadd.s32 %s77, 1
      $region35: #{ef_forward.1} parent=28 // loop_footer_branch
        %76 = sbr.rel target = $region31
      $region36: #{ef_forward.1} parent=28 // loop_exit
        _
      // While loop
      $region67: #{ef_forward.1} parent=28 // loop_pre_header
        _
      $region68: #{ef_forward.1} parent=28 // loop_header
        %s121 = sphi 0, %s123
        %p122 = scmp.ge.s32.totalorder %s121, %s64
      $region69: #{ef_forward.1} parent=28 // loop_header_branch
        %125 = sbr.rel (%p122) target = $region73
      $region70: #{ef_forward.1} parent=28 // loop_body
        %s126 = sadd.s32 %s61, %s121
        %s127 = sld [smem:[#allocation5 + %s126]]
        %s128 = smul.u32 1, 1
        %s129 = sshll.u32 %s128, 4
        %130 = dma.done [#allocation3], %s129
      $region71: #{ef_forward.1} parent=28 // loop_footer
        %s123 = sadd.s32 %s121, 1
      $region72: #{ef_forward.1} parent=28 // loop_footer_branch
        %120 = sbr.rel target = $region68
      $region73: #{ef_forward.1} parent=28 // loop_exit
        _
    $region29: #{ef_forward.1} parent=1 // pred_fallthru
      _
    %v131 = vld [vmem:[%s2] sm:$0xff]
    %v132 = vld [vmem:[#allocation2] sm:$0xff]
    %v133 = vsub.f32 %v131, %v132
    %v134 = vpack.c.bf16 %v133, %v133
    %v135 = vld [vmem:[#allocation7] sm:$0xf]
    %v136 = vld [vmem:[#allocation7 + $0x4] sm:$0xf]
    %v137 = vld [vmem:[#allocation7 + $0x8] sm:$0xf]
    %v138 = vld [vmem:[#allocation7 + $0xc] sm:$0xf]
    %v139 = vld [vmem:[#allocation7 + $0x10] sm:$0xf]
    %v140 = vld [vmem:[#allocation7 + $0x14] sm:$0xf]
    %v141 = vld [vmem:[#allocation7 + $0x18] sm:$0xf]
    %v142 = vld [vmem:[#allocation7 + $0x1c] sm:$0xf]
    %v143 = vld [vmem:[#allocation7 + $0x20] sm:$0xf]
    %v144 = vld [vmem:[#allocation7 + $0x24] sm:$0xf]
    %v145 = vld [vmem:[#allocation7 + $0x28] sm:$0xf]
    %v146 = vld [vmem:[#allocation7 + $0x2c] sm:$0xf]
    %v147 = vld [vmem:[#allocation7 + $0x30] sm:$0xf]
    %v148 = vld [vmem:[#allocation7 + $0x34] sm:$0xf]
    %v149 = vld [vmem:[#allocation7 + $0x38] sm:$0xf]
    %v150 = vld [vmem:[#allocation7 + $0x3c] sm:$0xf]
    %v167 = vunpack.c.l.b16 %v135
    %v168 = vunpack.c.l.b16 %v136
    %v169 = vunpack.c.l.b16 %v137
    %v170 = vunpack.c.l.b16 %v138
    %v171 = vunpack.c.l.b16 %v139
    %v172 = vunpack.c.l.b16 %v140
    %v173 = vunpack.c.l.b16 %v141
    %v174 = vunpack.c.l.b16 %v142
    %v175 = vunpack.c.l.b16 %v143
    %v176 = vunpack.c.l.b16 %v144
    %v177 = vunpack.c.l.b16 %v145
    %v178 = vunpack.c.l.b16 %v146
    %v179 = vunpack.c.l.b16 %v147
    %v180 = vunpack.c.l.b16 %v148
    %v181 = vunpack.c.l.b16 %v149
    %v182 = vunpack.c.l.b16 %v150
    %v183 = vpack.c.b16 %v168, %v167
    %v184 = vpack.c.b16 %v170, %v169
    %v185 = vpack.c.b16 %v172, %v171
    %v186 = vpack.c.b16 %v174, %v173
    %v187 = vpack.c.b16 %v176, %v175
    %v188 = vpack.c.b16 %v178, %v177
    %v189 = vpack.c.b16 %v180, %v179
    %v190 = vpack.c.b16 %v182, %v181
    %199 = vmatpush.bf16.msra.mxu0 %v190
    %200 = vmatpush.bf16.msra.mxu0 %v189
    %201 = vmatpush.bf16.msra.mxu0 %v188
    %202 = vmatpush.bf16.msra.mxu0 %v187
    %203 = vmatpush.bf16.msra.mxu0 %v186
    %204 = vmatpush.bf16.msra.mxu0 %v185
    %205 = vmatpush.bf16.msra.mxu0 %v184
    %206 = vmatpush.bf16.msra.mxu0 %v183
    %207 = vmatmul.bf16.gmra.mxu0 %v134
    %v208 = vpop.f32.mrf.mxu0
    %v209 = vadd.f32 0.0, %v208
    %v210 = vpop.f32.mrf.mxu0
    %211 = vdwg.mxu0
    %v212 = vpack.c.bf16 %v209, %v209
    %v213 = vld [vmem:[#allocation10] sm:$0xf]
    %v214 = vld [vmem:[#allocation10 + $0x4] sm:$0xf]
    %v215 = vld [vmem:[#allocation10 + $0x8] sm:$0xf]
    %v216 = vld [vmem:[#allocation10 + $0xc] sm:$0xf]
    %v217 = vld [vmem:[#allocation10 + $0x10] sm:$0xf]
    %v218 = vld [vmem:[#allocation10 + $0x14] sm:$0xf]
    %v219 = vld [vmem:[#allocation10 + $0x18] sm:$0xf]
    %v220 = vld [vmem:[#allocation10 + $0x1c] sm:$0xf]
    %v221 = vld [vmem:[#allocation10 + $0x20] sm:$0xf]
    %v222 = vld [vmem:[#allocation10 + $0x24] sm:$0xf]
    %v223 = vld [vmem:[#allocation10 + $0x28] sm:$0xf]
    %v224 = vld [vmem:[#allocation10 + $0x2c] sm:$0xf]
    %v225 = vld [vmem:[#allocation10 + $0x30] sm:$0xf]
    %v226 = vld [vmem:[#allocation10 + $0x34] sm:$0xf]
    %v227 = vld [vmem:[#allocation10 + $0x38] sm:$0xf]
    %v228 = vld [vmem:[#allocation10 + $0x3c] sm:$0xf]
    %v245 = vunpack.c.l.b16 %v213
    %v246 = vunpack.c.l.b16 %v214
    %v247 = vunpack.c.l.b16 %v215
    %v248 = vunpack.c.l.b16 %v216
    %v249 = vunpack.c.l.b16 %v217
    %v250 = vunpack.c.l.b16 %v218
    %v251 = vunpack.c.l.b16 %v219
    %v252 = vunpack.c.l.b16 %v220
    %v253 = vunpack.c.l.b16 %v221
    %v254 = vunpack.c.l.b16 %v222
    %v255 = vunpack.c.l.b16 %v223
    %v256 = vunpack.c.l.b16 %v224
    %v257 = vunpack.c.l.b16 %v225
    %v258 = vunpack.c.l.b16 %v226
    %v259 = vunpack.c.l.b16 %v227
    %v260 = vunpack.c.l.b16 %v228
    %v261 = vpack.c.b16 %v246, %v245
    %v262 = vpack.c.b16 %v248, %v247
    %v263 = vpack.c.b16 %v250, %v249
    %v264 = vpack.c.b16 %v252, %v251
    %v265 = vpack.c.b16 %v254, %v253
    %v266 = vpack.c.b16 %v256, %v255
    %v267 = vpack.c.b16 %v258, %v257
    %v268 = vpack.c.b16 %v260, %v259
    %277 = vmatpush.bf16.msra.mxu0 %v268
    %278 = vmatpush.bf16.msra.mxu0 %v267
    %279 = vmatpush.bf16.msra.mxu0 %v266
    %280 = vmatpush.bf16.msra.mxu0 %v265
    %281 = vmatpush.bf16.msra.mxu0 %v264
    %282 = vmatpush.bf16.msra.mxu0 %v263
    %283 = vmatpush.bf16.msra.mxu0 %v262
    %284 = vmatpush.bf16.msra.mxu0 %v261
    %285 = vmatmul.bf16.gmra.mxu0 %v212
    %v286 = vpop.f32.mrf.mxu0
    %v287 = vadd.f32 0.0, %v286
    %v288 = vpop.f32.mrf.mxu0
    %289 = vdwg.mxu0
    %v290 = vadd.f32 %v132, %v287
    %291 = vst [vmem:[#allocation12] sm:$0xff] %v290
    // While loop
    $region74: #{ef_forward.1} parent=1 // loop_pre_header
      _
    $region75: #{ef_forward.1} parent=1 // loop_header
      %s293 = sphi 0, %s295
      %p294 = scmp.ge.s32.totalorder %s293, %s64
    $region76: #{ef_forward.1} parent=1 // loop_header_branch
      %297 = sbr.rel (%p294) target = $region80
    $region77: #{ef_forward.1} parent=1 // loop_body
      %s298 = sadd.s32 %s61, %s293
      %s299 = sld [smem:[#allocation5 + %s298]]
      %s300 = scalar_lea.vmem [#allocation12], %s293
      %s301 = scalar_lea.vmem %s7, %s299
      %s302 = scalar_lea.sflag [#allocation3], 1
      // Predicated region
      $region81: #{ef_forward.1} parent=77 // pred_check
        _
      $region82: #{ef_forward.1} parent=77 // pred_check_branch
        %304 = sbr.rel target = $region84
      $region83: #{ef_forward.1} parent=77 // pred_region
        // Predicated region
        $region96: #{ef_forward.1} parent=83 // pred_check
          _
        $region97: #{ef_forward.1} parent=83 // pred_check_branch
          %320 = sbr.rel (0) target = $region99
        $region98: #{ef_forward.1} parent=83 // pred_region
          %s322 = ssub.s32 2, 1
          loop: start=0, step=1, limit=1
          $region100: #{ef_forward.1} parent=98 // loop_pre_header
            _
          $region101: #{ef_forward.1} parent=98 // loop_header
            %s324 = sphi 0, %s328
            %p325 = scmp.ge.s32.totalorder %s324, 1
            %s329 = sphi %s300, %s300
            %s330 = sphi %s301, %s301
          $region102: #{ef_forward.1} parent=98 // loop_header_branch
            %327 = sbr.rel (%p325) target = $region106
          $region103: #{ef_forward.1} parent=98 // loop_body
            %v331 = vld [vmem:[%s329] sm:%s322]
            %332 = vst [vmem:[%s330] sm:%s322] %v331
          $region104: #{ef_forward.1} parent=98 // loop_footer
            %s328 = sadd.s32 1, %s324
          $region105: #{ef_forward.1} parent=98 // loop_footer_branch
            %323 = sbr.rel target = $region101
          $region106: #{ef_forward.1} parent=98 // loop_exit
            _
        $region99: #{ef_forward.1} parent=83 // pred_fallthru
          _
      $region84: #{ef_forward.1} parent=77 // pred_fallthru
        _
      // Predicated region
      $region85: #{ef_forward.1} parent=77 // pred_check
        _
      $region86: #{ef_forward.1} parent=77 // pred_check_branch
        %306 = sbr.rel (0) target = $region88
      $region87: #{ef_forward.1} parent=77 // pred_region
        %s308 = ssub.s32 2, 1
        loop: start=0, step=1, limit=1
        $region89: #{ef_forward.1} parent=87 // loop_pre_header
          _
        $region90: #{ef_forward.1} parent=87 // loop_header
          %s310 = sphi 0, %s314
          %p311 = scmp.ge.s32.totalorder %s310, 1
          %s315 = sphi %s300, %s300
          %s316 = sphi %s301, %s301
        $region91: #{ef_forward.1} parent=87 // loop_header_branch
          %313 = sbr.rel (%p311) target = $region95
        $region92: #{ef_forward.1} parent=87 // loop_body
          %v317 = vld [vmem:[%s315] sm:%s308]
          %318 = vst [vmem:[%s316] sm:%s308] %v317
        $region93: #{ef_forward.1} parent=87 // loop_footer
          %s314 = sadd.s32 1, %s310
        $region94: #{ef_forward.1} parent=87 // loop_footer_branch
          %309 = sbr.rel target = $region90
        $region95: #{ef_forward.1} parent=87 // loop_exit
          _
      $region88: #{ef_forward.1} parent=77 // pred_fallthru
        _
      // Predicated region
      $region107: #{ef_forward.1} parent=77 // pred_check
        _
      $region108: #{ef_forward.1} parent=77 // pred_check_branch
        %335 = sbr.rel (0) target = $region110
      $region109: #{ef_forward.1} parent=77 // pred_region
        %336 = vsyncadd %s302, 16
      $region110: #{ef_forward.1} parent=77 // pred_fallthru
        _
    $region78: #{ef_forward.1} parent=1 // loop_footer
      %s295 = sadd.s32 %s293, 1
    $region79: #{ef_forward.1} parent=1 // loop_footer_branch
      %292 = sbr.rel target = $region75
    $region80: #{ef_forward.1} parent=1 // loop_exit
      _
    // While loop
    $region111: #{ef_forward.1} parent=1 // loop_pre_header
      _
    $region112: #{ef_forward.1} parent=1 // loop_header
      %s338 = sphi 0, %s340
      %p339 = scmp.ge.s32.totalorder %s338, %s64
    $region113: #{ef_forward.1} parent=1 // loop_header_branch
      %342 = sbr.rel (%p339) target = $region117
    $region114: #{ef_forward.1} parent=1 // loop_body
      %s343 = sadd.s32 %s61, %s338
      %s344 = sld [smem:[#allocation5 + %s343]]
      %s345 = scalar_lea.sflag [#allocation3], 1
      %s346 = smul.u32 1, 1
      %s347 = sshll.u32 %s346, 4
      %348 = dma.done %s345, %s347
    $region115: #{ef_forward.1} parent=1 // loop_footer
      %s340 = sadd.s32 %s338, 1
    $region116: #{ef_forward.1} parent=1 // loop_footer_branch
      %337 = sbr.rel target = $region112
    $region117: #{ef_forward.1} parent=1 // loop_exit
      _
    // Predicated region
    $region118: #{ef_forward.1} parent=1 // pred_check
      _
    $region119: #{ef_forward.1} parent=1 // pred_check_branch
      %350 = sbr.rel (0) target = $region121
    $region120: #{ef_forward.1} parent=1 // pred_region
      %352 = vsyncadd [#allocation9], 0
      %s354 = sshll.u32 [#allocation12], 4
      %s355 = int_to_ptr.vmem [resolvable:$true] %s354
      %s356 = sshll.u32 %s6, 4
      %s357 = int_to_ptr.hbm [resolvable:$true] %s356
      %359 = dma.vmem_to_hbm [thread:$0]  %s355, 128, %s357, [#allocation9]
    $region121: #{ef_forward.1} parent=1 // pred_fallthru
      _
    // Predicated region
    $region122: #{ef_forward.1} parent=1 // pred_check
      _
    $region123: #{ef_forward.1} parent=1 // pred_check_branch
      %361 = sbr.rel (0) target = $region125
    $region124: #{ef_forward.1} parent=1 // pred_region
      %363 = dma.done [#allocation9], 128
    $region125: #{ef_forward.1} parent=1 // pred_fallthru
      _
    %364 = vsyncpa [#allocation8], 1
    %365 = vsyncpa [#allocation11], 1
    %366 = vsyncpa [#allocation9], 1
  %367 = vsyncmov [#allocation3]
  %s368 = vpop.sfrf %367
  %p369 = scmp.eq.s32.totalorder %s368, 0
  %p370 = pneg %p369
  %372 = shalt.err (%p370)
  %s373 = scalar_lea.sflag [#allocation3], 1
  %374 = vsyncmov %s373
  %s375 = vpop.sfrf %374
  %p376 = scmp.eq.s32.totalorder %s375, 0
  %p377 = pneg %p376
  %379 = shalt.err (%p377)

</llo_original>
